<compile_context>
chip_gen: v5e
topology: v5e:2x2
jax: 0.10.0
libtpu: 0.0.40
codegen_flags: <defaults>
</compile_context>

<pallas_src>
import functools

import jax
import jax.numpy as jnp
from jax.experimental import pallas as pl
from jax.experimental.pallas import tpu as pltpu


def _layernorm_kernel(x_ref, w_ref, b_ref, o_ref, *, eps):
    # x: (TB, L)   w: (1, L)   b: (1, L)   o: (TB, L)
    x = x_ref[...].astype(jnp.float32)
    mean = jnp.mean(x, axis=-1, keepdims=True)
    xc = x - mean
    var = jnp.mean(xc * xc, axis=-1, keepdims=True)
    inv = jax.lax.rsqrt(var + eps)                # EUP rsqrt, f32 accumulation
    y = xc * inv
    out = y * w_ref[...].astype(jnp.float32) + b_ref[...].astype(jnp.float32)
    o_ref[...] = out.astype(o_ref.dtype)


def _round_up(n, m):
    return ((n + m - 1) // m) * m


def _round_down(n, m):
    return (n // m) * m


def _vmem_capacity_bytes():
    """Physical VMEM per TensorCore; conservative v7x fallback if unqueryable."""
    try:
        info = pltpu.get_tpu_info()
        cap = getattr(info, "vmem_capacity_bytes", None)
        if cap:
            return int(cap)
    except Exception:
        pass
    return 64 * 1024 * 1024


def layernorm_forward(x, w, b, *, eps=1e-5, target_block_bytes=None):
    """LayerNorm over the last axis of x. x: (..., L), w/b: (L,)."""
    orig_shape = x.shape
    L = orig_shape[-1]
    rows = 1
    for d in orig_shape[:-1]:
        rows *= d
    x2 = x.reshape(rows, L)

    itemsize = jnp.dtype(x.dtype).itemsize
    sublane_mult = max(8, 32 // itemsize)          # 8 f32, 16 bf16, 32 int8/fp8

    vmem_cap = _vmem_capacity_bytes()
    if target_block_bytes is None:
        # v5e/v6e (128 MiB VMEM): 4 MiB blocks; v7x (64 MiB VMEM): 2 MiB blocks.
        target_block_bytes = 4 * 1024 * 1024 if vmem_cap >= 96 * 1024 * 1024 \
            else 2 * 1024 * 1024
    # Leave headroom under physical VMEM for double-buffered x/out + f32 temps.
    vmem_limit_bytes = min(64 * 1024 * 1024, (vmem_cap * 3) // 4)

    # Bytes-targeted row tile, sublane-aligned.
    tb = _round_down(max(target_block_bytes // (L * itemsize), sublane_mult),
                     sublane_mult)
    tb = max(tb, sublane_mult)
    # Ensure >=4 grid steps when the input allows it (megacore sharding on v7x;
    # only binds for small inputs where the extra step overhead is negligible).
    quarter = _round_up(max(pl.cdiv(rows, 4), 1), sublane_mult)
    tb = min(tb, quarter)
    # Never exceed the (sublane-rounded) row count.
    tb = min(tb, _round_up(rows, sublane_mult))

    grid = (pl.cdiv(rows, tb),)                    # ragged last block is masked
    kernel = functools.partial(_layernorm_kernel, eps=eps)

    # Params as 2-D rows (TPU-friendly layout), VMEM-resident across the grid.
    w2 = w.reshape(1, L)
    b2 = b.reshape(1, L)

    cost = pl.CostEstimate(
        flops=8 * rows * L,                        # sub, sq, 2 means, scale, affine
        transcendentals=rows,                      # one rsqrt per row
        bytes_accessed=2 * rows * L * itemsize + 2 * L * itemsize,
    )

    out = pl.pallas_call(
        kernel,
        out_shape=jax.ShapeDtypeStruct((rows, L), x.dtype),
        grid_spec=pl.GridSpec(
            grid=grid,
            in_specs=[
                pl.BlockSpec((tb, L), lambda i: (i, 0)),   # x: tiled over rows
                pl.BlockSpec((1, L), lambda i: (0, 0)),    # w: resident
                pl.BlockSpec((1, L), lambda i: (0, 0)),    # b: resident
            ],
            out_specs=pl.BlockSpec((tb, L), lambda i: (i, 0)),
        ),
        compiler_params=pltpu.CompilerParams(
            dimension_semantics=("parallel",),             # megacore / multi-TC
            vmem_limit_bytes=vmem_limit_bytes,
        ),
        cost_estimate=cost,
    )(x2, w2, b2)

    return out.reshape(orig_shape)


def layernorm_reference(x, w, b, *, eps=1e-5):
    xc = x - jnp.mean(x, axis=-1, keepdims=True)
    scale = jnp.sqrt(jnp.mean(xc * xc, axis=-1, keepdims=True) + eps)
    return (xc / scale) * w + b


if __name__ == "__main__":
    # Small shapes consistent with the module: x is (batch, seq, length),
    # LayerNorm(length=128). rows = 2*128 = 256 -> 4 grid steps (>=4-step cap).
    batch, seq, length = 2, 128, 128

    key = jax.random.PRNGKey(0)
    k_x, k_w, k_b = jax.random.split(key, 3)

    x = jax.random.normal(k_x, (batch, seq, length), dtype=jnp.float32)
    # Module init is w=ones, b=zeros; perturb them so the affine part is tested.
    w = jnp.ones((length,), jnp.float32) + 0.1 * jax.random.normal(k_w, (length,))
    b = jnp.zeros((length,), jnp.float32) + 0.1 * jax.random.normal(k_b, (length,))

    out = layernorm_forward(x, w, b, eps=1e-5)
    out = jax.block_until_ready(out)

    ref = layernorm_reference(x, w, b, eps=1e-5)
    assert out.shape == x.shape
    assert jnp.allclose(out, ref, atol=1e-5, rtol=1e-5), "mismatch vs reference"

    # Also exercise a non-divisible row count (ragged last block, no pad path).
    x_odd = jax.random.normal(k_x, (3, 37, length), dtype=jnp.float32)
    out_odd = jax.block_until_ready(layernorm_forward(x_odd, w, b, eps=1e-5))
    ref_odd = layernorm_reference(x_odd, w, b, eps=1e-5)
    assert jnp.allclose(out_odd, ref_odd, atol=1e-5, rtol=1e-5), "ragged mismatch"

    print("KERNEL_OK")
</pallas_src>

<mosaic_0001>
module attributes {stable_mosaic.version = 11 : i64} {
  func.func @_layernorm_kernel(%arg0: i32, %arg1: memref<64x128xf32, #tpu.memory_space<vmem>>, %arg2: memref<1x128xf32, #tpu.memory_space<vmem>>, %arg3: memref<1x128xf32, #tpu.memory_space<vmem>>, %arg4: memref<64x128xf32, #tpu.memory_space<vmem>>) attributes {dimension_semantics = [#tpu.dimension_semantics<parallel>], iteration_bounds = array<i64: 4>, scalar_prefetch = 0 : i64, scratch_operands = 0 : i64, tpu.core_type = #tpu.core_type<tc>, window_params = [{transform_indices = @transform_0, window_bounds = array<i64: 64, 128>}, {pipeline_mode = #tpu.pipeline_mode<synchronous>, transform_indices = @transform_1, window_bounds = array<i64: 1, 128>}, {pipeline_mode = #tpu.pipeline_mode<synchronous>, transform_indices = @transform_2, window_bounds = array<i64: 1, 128>}, {transform_indices = @transform_3, window_bounds = array<i64: 64, 128>}]} {
    %c0 = arith.constant 0 : index
    %c0_0 = arith.constant 0 : index
    %0 = vector.load %arg1[%c0, %c0_0] : memref<64x128xf32, #tpu.memory_space<vmem>>, vector<64x128xf32>
    %cst = arith.constant dense<0.000000e+00> : vector<64xf32>
    %1 = vector.multi_reduction <add>, %0, %cst [1] : vector<64x128xf32> to vector<64xf32>
    %2 = vector.shape_cast %1 : vector<64xf32> to vector<64x1xf32>
    %cst_1 = arith.constant 1.280000e+02 : f32
    %3 = vector.broadcast %cst_1 : f32 to vector<64x1xf32>
    %4 = arith.divf %2, %3 : vector<64x1xf32>
    %5 = vector.broadcast %4 : vector<64x1xf32> to vector<64x128xf32>
    %6 = arith.subf %0, %5 : vector<64x128xf32>
    %7 = arith.mulf %6, %6 : vector<64x128xf32>
    %cst_2 = arith.constant dense<0.000000e+00> : vector<64xf32>
    %8 = vector.multi_reduction <add>, %7, %cst_2 [1] : vector<64x128xf32> to vector<64xf32>
    %9 = vector.shape_cast %8 : vector<64xf32> to vector<64x1xf32>
    %cst_3 = arith.constant 1.280000e+02 : f32
    %10 = vector.broadcast %cst_3 : f32 to vector<64x1xf32>
    %11 = arith.divf %9, %10 : vector<64x1xf32>
    %cst_4 = arith.constant 9.99999974E-6 : f32
    %12 = vector.broadcast %cst_4 : f32 to vector<64x1xf32>
    %13 = arith.addf %11, %12 : vector<64x1xf32>
    %14 = math.rsqrt %13 : vector<64x1xf32>
    %15 = vector.broadcast %14 : vector<64x1xf32> to vector<64x128xf32>
    %16 = arith.mulf %6, %15 : vector<64x128xf32>
    %c0_5 = arith.constant 0 : index
    %c0_6 = arith.constant 0 : index
    %17 = vector.load %arg2[%c0_5, %c0_6] : memref<1x128xf32, #tpu.memory_space<vmem>>, vector<1x128xf32>
    %18 = vector.broadcast %17 : vector<1x128xf32> to vector<64x128xf32>
    %19 = arith.mulf %16, %18 : vector<64x128xf32>
    %c0_7 = arith.constant 0 : index
    %c0_8 = arith.constant 0 : index
    %20 = vector.load %arg3[%c0_7, %c0_8] : memref<1x128xf32, #tpu.memory_space<vmem>>, vector<1x128xf32>
    %21 = vector.broadcast %20 : vector<1x128xf32> to vector<64x128xf32>
    %22 = arith.addf %19, %21 : vector<64x128xf32>
    %c0_9 = arith.constant 0 : index
    %c0_10 = arith.constant 0 : index
    %23 = vector.load %arg4[%c0_9, %c0_10] : memref<64x128xf32, #tpu.memory_space<vmem>>, vector<64x128xf32>
    tpu.vector_store %arg4[%c0_9, %c0_10], %22 {strides = array<i32>} : memref<64x128xf32, #tpu.memory_space<vmem>>, vector<64x128xf32>,
    return
  }
  func.func @transform_0(%arg0: i32) -> (i32, i32) {
    %c0_i32 = arith.constant 0 : i32
    %c0_i32_0 = arith.constant 0 : i32
    return %arg0, %c0_i32 : i32, i32
  }
  func.func @transform_1(%arg0: i32) -> (i32, i32) {
    %c0_i32 = arith.constant 0 : i32
    %c0_i32_0 = arith.constant 0 : i32
    %c0_i32_1 = arith.constant 0 : i32
    return %c0_i32, %c0_i32_0 : i32, i32
  }
  func.func @transform_2(%arg0: i32) -> (i32, i32) {
    %c0_i32 = arith.constant 0 : i32
    %c0_i32_0 = arith.constant 0 : i32
    %c0_i32_1 = arith.constant 0 : i32
    return %c0_i32, %c0_i32_0 : i32, i32
  }
  func.func @transform_3(%arg0: i32) -> (i32, i32) {
    %c0_i32 = arith.constant 0 : i32
    %c0_i32_0 = arith.constant 0 : i32
    return %arg0, %c0_i32 : i32, i32
  }
}

</mosaic_0001>

<llo_original>
// kernel: tpu_custom_call.1
$region0: #{tpu_custom_call.1}
  #allocation0 [shape = 'u32[]', space=smem, size = 0x4, offset = 0x4, fixed_abs, tag = 'smem constant byte address 0x4 - core index']
  #allocation1 [shape = 'u32[72,128]{1,0:T(1,128)}', space=vmem, size = 0x9000, scoped, tag = 'internal scratch']
  %s0 = inlined_call_operand.hbm [shape: f32[256,128], index: 0, kind: input, shape index: {}]
  %s1 = inlined_call_operand.hbm [shape: f32[1,128], index: 1, kind: input, shape index: {}]
  %s2 = inlined_call_operand.vmem [shape: f32[1,128], index: 2, kind: input, shape index: {}]
  %s3 = inlined_call_operand.hbm [shape: f32[256,128], index: 3, kind: output, shape index: {}]
  %s4 = sld [smem:[#allocation0]]
  $region53: #{tpu_custom_call.1} parent=0
    _
  %s6 = ssub.s32 1, %s4
  %s7 = scalar_select 0, %s6, %s4
  $region1: #{tpu_custom_call.1} parent=0
    #allocation2 [shape = 'u8[65536]{0}', space=vmem, size = 0x10000, scoped, tag = 'input window, operand 0']
    #allocation3 [shape = 's32[2]{0}', space=sflag, size = 0x8, scoped, tag = 'scoped memory for tpu_custom_call.1']
    #allocation4 [shape = 's32[2]{0}', space=sflag, size = 0x8, scoped, tag = 'scoped memory for tpu_custom_call.1']
    #allocation5 [shape = 'u8[512]{0}', space=vmem, size = 0x400, scoped, tag = 'input window, operand 1, single buffered']
    #allocation6 [shape = 's32[1]{0}', space=sflag, size = 0x4, scoped, tag = 'scoped memory for tpu_custom_call.1']
    #allocation7 [shape = 'u8[65536]{0}', space=vmem, size = 0x10000, scoped, tag = 'output window, operand 0']
    %8 = vsyncpa [#allocation3], 0
    %s9 = scalar_lea.sflag [#allocation3], 1
    %10 = vsyncpa %s9, 0
    %11 = vsyncpa [#allocation6], 0
    %12 = vsyncpa [#allocation4], 0
    %s13 = scalar_lea.sflag [#allocation4], 1
    %14 = vsyncpa %s13, 0
    loop: start=0, step=1, limit=6
    $region2: #{tpu_custom_call.1} parent=1 // loop_pre_header
      _
    $region3: #{tpu_custom_call.1} parent=1 // loop_header
      %s16 = sphi 0, %s20
      %p17 = scmp.ge.s32.totalorder %s16, 6
      %s26 = sphi 0, %s28
      %s29 = sphi 0, %s26
      %s30 = sphi 0, %s29
      %s46 = sphi 0, %s30
      %s50 = sphi 0, %s50
      %s52 = sphi 0, %s50
      %s53 = sphi 0, %s52
      %s67 = sphi 0, %s53
      %s71 = sphi 0, %s71
      %s73 = sphi 0, %s71
      %s74 = sphi 0, %s73
      %s88 = sphi 0, %s74
      %s94 = sphi 0, %s96
      %s97 = sphi 0, %s94
      %s98 = sphi 0, %s97
      %s114 = sphi 0, %s98
    $region4: #{tpu_custom_call.1} parent=1 // loop_header_branch
      %19 = sbr.rel (%p17) target = $region8
    $region5: #{tpu_custom_call.1} parent=1 // loop_body
      %s21 = ssub.s32 %s16, 1
      %s22 = ssub.s32 %s16, 2
      %s23 = sadd.s32 %s16, 1
      %s24 = ssub.s32 %s16, %s23
      %p25 = scmp.eq.s32.totalorder %s24, 0
      %s27 = sadd.s32 %s26, 1
      %s28 = scalar_select %p25, %s26, %s27
      %p31 = pneg %p25
      %p32 = scmp.eq.s32.totalorder %s16, 3
      %p33 = por %p31, %p32
      %p34 = scmp.ne.s32.totalorder %s26, %s29
      %p35 = scmp.eq.s32.totalorder %s16, 0
      %p36 = por %p34, %p35
      %p37 = scmp.ne.s32.totalorder %s26, %s29
      %p38 = scmp.eq.s32.totalorder %s21, 3
      %p39 = por %p37, %p38
      %p40 = scmp.ne.s32.totalorder %s29, %s30
      %p41 = scmp.eq.s32.totalorder %s21, 0
      %p42 = por %p40, %p41
      %p43 = scmp.ne.s32.totalorder %s29, %s30
      %p44 = scmp.eq.s32.totalorder %s22, 3
      %p45 = por %p43, %p44
      %p47 = scmp.ne.s32.totalorder %s30, %s46
      %p48 = scmp.eq.s32.totalorder %s22, 0
      %p49 = por %p47, %p48
      %s51 = sadd.s32 %s50, 1
      %p54 = scmp.eq.s32.totalorder %s16, 3
      %p55 = scmp.ne.s32.totalorder %s50, %s52
      %p56 = scmp.eq.s32.totalorder %s16, 0
      %p57 = por %p55, %p56
      %p58 = scmp.ne.s32.totalorder %s50, %s52
      %p59 = scmp.eq.s32.totalorder %s21, 3
      %p60 = por %p58, %p59
      %p61 = scmp.ne.s32.totalorder %s52, %s53
      %p62 = scmp.eq.s32.totalorder %s21, 0
      %p63 = por %p61, %p62
      %p64 = scmp.ne.s32.totalorder %s52, %s53
      %p65 = scmp.eq.s32.totalorder %s22, 3
      %p66 = por %p64, %p65
      %p68 = scmp.ne.s32.totalorder %s53, %s67
      %p69 = scmp.eq.s32.totalorder %s22, 0
      %p70 = por %p68, %p69
      %s72 = sadd.s32 %s71, 1
      %p75 = scmp.eq.s32.totalorder %s16, 3
      %p76 = scmp.ne.s32.totalorder %s71, %s73
      %p77 = scmp.eq.s32.totalorder %s16, 0
      %p78 = por %p76, %p77
      %p79 = scmp.ne.s32.totalorder %s71, %s73
      %p80 = scmp.eq.s32.totalorder %s21, 3
      %p81 = por %p79, %p80
      %p82 = scmp.ne.s32.totalorder %s73, %s74
      %p83 = scmp.eq.s32.totalorder %s21, 0
      %p84 = por %p82, %p83
      %p85 = scmp.ne.s32.totalorder %s73, %s74
      %p86 = scmp.eq.s32.totalorder %s22, 3
      %p87 = por %p85, %p86
      %p89 = scmp.ne.s32.totalorder %s74, %s88
      %p90 = scmp.eq.s32.totalorder %s22, 0
      %p91 = por %p89, %p90
      %s92 = ssub.s32 %s16, %s23
      %p93 = scmp.eq.s32.totalorder %s92, 0
      %s95 = sadd.s32 %s94, 1
      %s96 = scalar_select %p93, %s94, %s95
      %p99 = pneg %p93
      %p100 = scmp.eq.s32.totalorder %s16, 3
      %p101 = por %p99, %p100
      %p102 = scmp.ne.s32.totalorder %s94, %s97
      %p103 = scmp.eq.s32.totalorder %s16, 0
      %p104 = por %p102, %p103
      %p105 = scmp.ne.s32.totalorder %s94, %s97
      %p106 = scmp.eq.s32.totalorder %s21, 3
      %p107 = por %p105, %p106
      %p108 = scmp.ne.s32.totalorder %s97, %s98
      %p109 = scmp.eq.s32.totalorder %s21, 0
      %p110 = por %p108, %p109
      %p111 = scmp.ne.s32.totalorder %s97, %s98
      %p112 = scmp.eq.s32.totalorder %s22, 3
      %p113 = por %p111, %p112
      %p115 = scmp.ne.s32.totalorder %s98, %s114
      %p116 = scmp.eq.s32.totalorder %s22, 0
      %p117 = por %p115, %p116
      %p118 = scmp.le.s32.totalorder 1, %s16
      %p119 = scmp.lt.s32.totalorder %s16, 5
      %p120 = pnand %p118, %p119
      %p121 = pneg %p120
      // Predicated region
      $region9: #{tpu_custom_call.1} parent=5 // pred_check
        _
      $region10: #{tpu_custom_call.1} parent=5 // pred_check_branch
        %123 = sbr.rel (%p120) target = $region12
      $region11: #{tpu_custom_call.1} parent=5 // pred_region
        %s124 = ssub.s32 %s16, 1
        // Predicated region
        $region13: #{tpu_custom_call.1} parent=11 // pred_check
          %p125 = pneg %p63
        $region14: #{tpu_custom_call.1} parent=11 // pred_check_branch
          %127 = sbr.rel (%p125) target = $region16
        $region15: #{tpu_custom_call.1} parent=11 // pred_region
          %129 = vsyncadd [#allocation6], 0
          %s131 = sshll.u32 %s1, 4
          %s132 = int_to_ptr.hbm [resolvable:$true] %s131
          %s133 = sshll.u32 [#allocation5], 4
          %s134 = int_to_ptr.vmem [resolvable:$true] %s133
          %136 = dma.hbm_to_vmem [thread:$0]  %s132, 16, %s134, [#allocation6]
        $region16: #{tpu_custom_call.1} parent=11 // pred_fallthru
          _
        // Predicated region
        $region17: #{tpu_custom_call.1} parent=11 // pred_check
          %p137 = pneg %p84
        $region18: #{tpu_custom_call.1} parent=11 // pred_check_branch
          %139 = sbr.rel (%p137) target = $region20
        $region19: #{tpu_custom_call.1} parent=11 // pred_region
          _
        $region20: #{tpu_custom_call.1} parent=11 // pred_fallthru
          _
      $region12: #{tpu_custom_call.1} parent=5 // pred_fallthru
        _
      %p140 = scmp.lt.s32.totalorder %s16, 4
      // Predicated region
      $region21: #{tpu_custom_call.1} parent=5 // pred_check
        %p141 = pneg %p140
      $region22: #{tpu_custom_call.1} parent=5 // pred_check_branch
        %143 = sbr.rel (%p141) target = $region24
      $region23: #{tpu_custom_call.1} parent=5 // pred_region
        // Predicated region
        $region25: #{tpu_custom_call.1} parent=23 // pred_check
          %p144 = pneg %p36
        $region26: #{tpu_custom_call.1} parent=23 // pred_check_branch
          %146 = sbr.rel (%p144) target = $region28
        $region27: #{tpu_custom_call.1} parent=23 // pred_region
          %s147 = sand.u32 %s26, 1
          %s148 = scalar_lea.sflag [#allocation3], %s147
          %s149 = sand.u32 %s26, 1
          %s150 = smul.addr %s149, 64
          %s151 = scalar_lea.vmem [#allocation2], %s150
          %s152 = smul.u32 8, %s16
          %154 = vsyncadd %s148, 0
          %s155 = smul.addr %s152, 8
          %s156 = scalar_lea.hbm %s0, %s155
          %s157 = sshll.u32 %s156, 4
          %s158 = int_to_ptr.hbm [resolvable:$true] %s157
          %s159 = sshll.u32 %s151, 4
          %s160 = int_to_ptr.vmem [resolvable:$true] %s159
          %165 = dma.hbm_to_vmem [thread:$0]  %s158, 1024, %s160, %s148, 128, 128, 8
        $region28: #{tpu_custom_call.1} parent=23 // pred_fallthru
          _
      $region24: #{tpu_custom_call.1} parent=5 // pred_fallthru
        _
      %p166 = scmp.le.s32.totalorder 1, %s16
      %p167 = scmp.lt.s32.totalorder %s16, 5
      %p168 = pnand %p166, %p167
      %p169 = pneg %p168
      // Predicated region
      $region29: #{tpu_custom_call.1} parent=5 // pred_check
        _
      $region30: #{tpu_custom_call.1} parent=5 // pred_check_branch
        %171 = sbr.rel (%p168) target = $region32
      $region31: #{tpu_custom_call.1} parent=5 // pred_region
        %s172 = ssub.s32 %s16, 1
        %s173 = sand.u32 %s29, 1
        %s174 = scalar_lea.sflag [#allocation3], %s173
        %s175 = sand.u32 %s29, 1
        %s176 = smul.addr %s175, 64
        %s177 = scalar_lea.vmem [#allocation2], %s176
        // Predicated region
        $region33: #{tpu_custom_call.1} parent=31 // pred_check
          %p178 = pneg %p42
        $region34: #{tpu_custom_call.1} parent=31 // pred_check_branch
          %180 = sbr.rel (%p178) target = $region36
        $region35: #{tpu_custom_call.1} parent=31 // pred_region
          %182 = dma.done %s174, 1024
        $region36: #{tpu_custom_call.1} parent=31 // pred_fallthru
          _
        // Predicated region
        $region37: #{tpu_custom_call.1} parent=31 // pred_check
          %p183 = pneg %p63
        $region38: #{tpu_custom_call.1} parent=31 // pred_check_branch
          %185 = sbr.rel (%p183) target = $region40
        $region39: #{tpu_custom_call.1} parent=31 // pred_region
          %187 = dma.done [#allocation6], 16
        $region40: #{tpu_custom_call.1} parent=31 // pred_fallthru
          _
        %s188 = sand.u32 %s29, 1
        %s189 = scalar_lea.sflag [#allocation3], %s188
        %s190 = sand.u32 %s29, 1
        %s191 = smul.addr %s190, 64
        %s192 = scalar_lea.vmem [#allocation2], %s191
        %p193 = pneg %p42
        %p194 = pneg %p39
        %p195 = pneg %p63
        %p196 = pneg %p60
        %p197 = pneg %p84
        %p198 = pneg %p81
        %p199 = pneg %p110
        %p200 = pneg %p107
        %s201 = sand.u32 %s97, 1
        %s202 = scalar_lea.sflag [#allocation4], %s201
        %s203 = sand.u32 %s97, 1
        %s204 = smul.addr %s203, 64
        %s205 = scalar_lea.vmem [#allocation7], %s204
        %s206 = smul.u32 8, %s21
        %s207 = smul.u32 8, %s21
        %v208 = vld [vmem:[%s177] sm:$0xff]
        %v209 = vld [vmem:[%s177 + $0x8] sm:$0xff]
        %v210 = vld [vmem:[%s177 + $0x10] sm:$0xff]
        %v211 = vld [vmem:[%s177 + $0x18] sm:$0xff]
        %v212 = vld [vmem:[%s177 + $0x20] sm:$0xff]
        %v213 = vld [vmem:[%s177 + $0x28] sm:$0xff]
        %v214 = vld [vmem:[%s177 + $0x30] sm:$0xff]
        %v215 = vld [vmem:[%s177 + $0x38] sm:$0xff]
        %216 = vadd.xlane.f32.xlu0 %v208
        %v217 = vpop.xlane.xlu0 %216
        %218 = vadd.xlane.f32.xlu0 %v209
        %v219 = vpop.xlane.xlu0 %218
        %220 = vadd.xlane.f32.xlu0 %v210
        %v221 = vpop.xlane.xlu0 %220
        %222 = vadd.xlane.f32.xlu0 %v211
        %v223 = vpop.xlane.xlu0 %222
        %224 = vadd.xlane.f32.xlu0 %v212
        %v225 = vpop.xlane.xlu0 %224
        %226 = vadd.xlane.f32.xlu0 %v213
        %v227 = vpop.xlane.xlu0 %226
        %228 = vadd.xlane.f32.xlu0 %v214
        %v229 = vpop.xlane.xlu0 %228
        %230 = vadd.xlane.f32.xlu0 %v215
        %v231 = vpop.xlane.xlu0 %230
        %v232 = vrcp.pop 128.0
        %v233 = vmul.f32 128.0, %v232
        %v234 = vsub.f32 1.0, %v233
        %v235 = vmul.f32 %v232, %v234
        %v236 = vadd.f32 %v232, %v235
        %vm237 = vweird.f32 %v232
        %v238 = vsel %vm237, %v232, %v236
        %v239 = vmul.f32 %v217, %v238
        %v240 = vmul.f32 %v219, %v238
        %v241 = vmul.f32 %v221, %v238
        %v242 = vmul.f32 %v223, %v238
        %v243 = vmul.f32 %v225, %v238
        %v244 = vmul.f32 %v227, %v238
        %v245 = vmul.f32 %v229, %v238
        %v246 = vmul.f32 %v231, %v238
        %v247 = vsub.f32 %v208, %v239
        %v248 = vsub.f32 %v209, %v240
        %v249 = vsub.f32 %v210, %v241
        %v250 = vsub.f32 %v211, %v242
        %v251 = vsub.f32 %v212, %v243
        %v252 = vsub.f32 %v213, %v244
        %v253 = vsub.f32 %v214, %v245
        %v254 = vsub.f32 %v215, %v246
        %v255 = vmul.f32 %v247, %v247
        %v256 = vmul.f32 %v248, %v248
        %v257 = vmul.f32 %v249, %v249
        %v258 = vmul.f32 %v250, %v250
        %v259 = vmul.f32 %v251, %v251
        %v260 = vmul.f32 %v252, %v252
        %v261 = vmul.f32 %v253, %v253
        %v262 = vmul.f32 %v254, %v254
        %263 = vadd.xlane.f32.xlu0 %v255
        %v264 = vpop.xlane.xlu0 %263
        %265 = vadd.xlane.f32.xlu0 %v256
        %v266 = vpop.xlane.xlu0 %265
        %267 = vadd.xlane.f32.xlu0 %v257
        %v268 = vpop.xlane.xlu0 %267
        %269 = vadd.xlane.f32.xlu0 %v258
        %v270 = vpop.xlane.xlu0 %269
        %271 = vadd.xlane.f32.xlu0 %v259
        %v272 = vpop.xlane.xlu0 %271
        %273 = vadd.xlane.f32.xlu0 %v260
        %v274 = vpop.xlane.xlu0 %273
        %275 = vadd.xlane.f32.xlu0 %v261
        %v276 = vpop.xlane.xlu0 %275
        %277 = vadd.xlane.f32.xlu0 %v262
        %v278 = vpop.xlane.xlu0 %277
        %v279 = vmul.f32 %v264, %v238
        %v280 = vmul.f32 %v266, %v238
        %v281 = vmul.f32 %v268, %v238
        %v282 = vmul.f32 %v270, %v238
        %v283 = vmul.f32 %v272, %v238
        %v284 = vmul.f32 %v274, %v238
        %v285 = vmul.f32 %v276, %v238
        %v286 = vmul.f32 %v278, %v238
        %v287 = vadd.f32 %v279, 1e-05
        %v288 = vadd.f32 %v280, 1e-05
        %v289 = vadd.f32 %v281, 1e-05
        %v290 = vadd.f32 %v282, 1e-05
        %v291 = vadd.f32 %v283, 1e-05
        %v292 = vadd.f32 %v284, 1e-05
        %v293 = vadd.f32 %v285, 1e-05
        %v294 = vadd.f32 %v286, 1e-05
        %v295 = vrsqrt.pop %v287
        %v296 = vmul.f32 %v295, %v287
        %v297 = vmul.f32 %v296, %v295
        %v298 = vmul.f32 0.5, %v297
        %v299 = vsub.f32 1.5, %v298
        %v300 = vmul.f32 %v295, %v299
        %vm301 = vweird.f32 %v287
        %vm302 = vweird.f32 %v295
        %vm303 = vmor %vm301, %vm302
        %v304 = vsel %vm303, %v295, %v300
        %v305 = vrsqrt.pop %v288
        %v306 = vmul.f32 %v305, %v288
        %v307 = vmul.f32 %v306, %v305
        %v308 = vmul.f32 0.5, %v307
        %v309 = vsub.f32 1.5, %v308
        %v310 = vmul.f32 %v305, %v309
        %vm311 = vweird.f32 %v288
        %vm312 = vweird.f32 %v305
        %vm313 = vmor %vm311, %vm312
        %v314 = vsel %vm313, %v305, %v310
        %v315 = vrsqrt.pop %v289
        %v316 = vmul.f32 %v315, %v289
        %v317 = vmul.f32 %v316, %v315
        %v318 = vmul.f32 0.5, %v317
        %v319 = vsub.f32 1.5, %v318
        %v320 = vmul.f32 %v315, %v319
        %vm321 = vweird.f32 %v289
        %vm322 = vweird.f32 %v315
        %vm323 = vmor %vm321, %vm322
        %v324 = vsel %vm323, %v315, %v320
        %v325 = vrsqrt.pop %v290
        %v326 = vmul.f32 %v325, %v290
        %v327 = vmul.f32 %v326, %v325
        %v328 = vmul.f32 0.5, %v327
        %v329 = vsub.f32 1.5, %v328
        %v330 = vmul.f32 %v325, %v329
        %vm331 = vweird.f32 %v290
        %vm332 = vweird.f32 %v325
        %vm333 = vmor %vm331, %vm332
        %v334 = vsel %vm333, %v325, %v330
        %v335 = vrsqrt.pop %v291
        %v336 = vmul.f32 %v335, %v291
        %v337 = vmul.f32 %v336, %v335
        %v338 = vmul.f32 0.5, %v337
        %v339 = vsub.f32 1.5, %v338
        %v340 = vmul.f32 %v335, %v339
        %vm341 = vweird.f32 %v291
        %vm342 = vweird.f32 %v335
        %vm343 = vmor %vm341, %vm342
        %v344 = vsel %vm343, %v335, %v340
        %v345 = vrsqrt.pop %v292
        %v346 = vmul.f32 %v345, %v292
        %v347 = vmul.f32 %v346, %v345
        %v348 = vmul.f32 0.5, %v347
        %v349 = vsub.f32 1.5, %v348
        %v350 = vmul.f32 %v345, %v349
        %vm351 = vweird.f32 %v292
        %vm352 = vweird.f32 %v345
        %vm353 = vmor %vm351, %vm352
        %v354 = vsel %vm353, %v345, %v350
        %v355 = vrsqrt.pop %v293
        %v356 = vmul.f32 %v355, %v293
        %v357 = vmul.f32 %v356, %v355
        %v358 = vmul.f32 0.5, %v357
        %v359 = vsub.f32 1.5, %v358
        %v360 = vmul.f32 %v355, %v359
        %vm361 = vweird.f32 %v293
        %vm362 = vweird.f32 %v355
        %vm363 = vmor %vm361, %vm362
        %v364 = vsel %vm363, %v355, %v360
        %v365 = vrsqrt.pop %v294
        %v366 = vmul.f32 %v365, %v294
        %v367 = vmul.f32 %v366, %v365
        %v368 = vmul.f32 0.5, %v367
        %v369 = vsub.f32 1.5, %v368
        %v370 = vmul.f32 %v365, %v369
        %vm371 = vweird.f32 %v294
        %vm372 = vweird.f32 %v365
        %vm373 = vmor %vm371, %vm372
        %v374 = vsel %vm373, %v365, %v370
        %v375 = vmul.f32 %v247, %v304
        %v376 = vmul.f32 %v248, %v314
        %v377 = vmul.f32 %v249, %v324
        %v378 = vmul.f32 %v250, %v334
        %v379 = vmul.f32 %v251, %v344
        %v380 = vmul.f32 %v252, %v354
        %v381 = vmul.f32 %v253, %v364
        %v382 = vmul.f32 %v254, %v374
        %v383 = vld [vmem:[#allocation5] sm:$0x1]
        %v385 = vperm.slane %v383, 0
        %v387 = vmul.f32 %v375, %v385
        %v388 = vmul.f32 %v376, %v385
        %v389 = vmul.f32 %v377, %v385
        %v390 = vmul.f32 %v378, %v385
        %v391 = vmul.f32 %v379, %v385
        %v392 = vmul.f32 %v380, %v385
        %v393 = vmul.f32 %v381, %v385
        %v394 = vmul.f32 %v382, %v385
        %v395 = vld [vmem:[%s2] sm:$0x1]
        %v397 = vperm.slane %v395, 0
        %v399 = vadd.f32 %v387, %v397
        %v400 = vadd.f32 %v388, %v397
        %v401 = vadd.f32 %v389, %v397
        %v402 = vadd.f32 %v390, %v397
        %v403 = vadd.f32 %v391, %v397
        %v404 = vadd.f32 %v392, %v397
        %v405 = vadd.f32 %v393, %v397
        %v406 = vadd.f32 %v394, %v397
        %407 = vst [vmem:[%s205] sm:$0xff] %v399
        %408 = vst [vmem:[%s205 + $0x8] sm:$0xff] %v400
        %409 = vst [vmem:[%s205 + $0x10] sm:$0xff] %v401
        %410 = vst [vmem:[%s205 + $0x18] sm:$0xff] %v402
        %411 = vst [vmem:[%s205 + $0x20] sm:$0xff] %v403
        %412 = vst [vmem:[%s205 + $0x28] sm:$0xff] %v404
        %413 = vst [vmem:[%s205 + $0x30] sm:$0xff] %v405
        %414 = vst [vmem:[%s205 + $0x38] sm:$0xff] %v406
        %s415 = sand.u32 %s97, 1
        %s416 = scalar_lea.sflag [#allocation4], %s415
        %s417 = sand.u32 %s97, 1
        %s418 = smul.addr %s417, 64
        %s419 = scalar_lea.vmem [#allocation7], %s418
        // Predicated region
        $region41: #{tpu_custom_call.1} parent=31 // pred_check
          %p420 = pneg %p107
        $region42: #{tpu_custom_call.1} parent=31 // pred_check_branch
          %422 = sbr.rel (%p420) target = $region44
        $region43: #{tpu_custom_call.1} parent=31 // pred_region
          %s423 = smul.u32 8, %s21
          %425 = vsyncadd %s416, 0
          %s426 = smul.addr %s423, 8
          %s427 = scalar_lea.hbm %s3, %s426
          %s428 = sshll.u32 %s419, 4
          %s429 = int_to_ptr.vmem [resolvable:$true] %s428
          %s430 = sshll.u32 %s427, 4
          %s431 = int_to_ptr.hbm [resolvable:$true] %s430
          %436 = dma.vmem_to_hbm [thread:$0]  %s429, 1024, %s431, %s416, 128, 128, 8
        $region44: #{tpu_custom_call.1} parent=31 // pred_fallthru
          _
      $region32: #{tpu_custom_call.1} parent=5 // pred_fallthru
        _
      %p437 = scmp.le.s32.totalorder 2, %s16
      // Predicated region
      $region45: #{tpu_custom_call.1} parent=5 // pred_check
        %p438 = pneg %p437
      $region46: #{tpu_custom_call.1} parent=5 // pred_check_branch
        %440 = sbr.rel (%p438) target = $region48
      $region47: #{tpu_custom_call.1} parent=5 // pred_region
        %s441 = ssub.s32 %s16, 2
        // Predicated region
        $region49: #{tpu_custom_call.1} parent=47 // pred_check
          %p442 = pneg %p113
        $region50: #{tpu_custom_call.1} parent=47 // pred_check_branch
          %444 = sbr.rel (%p442) target = $region52
        $region51: #{tpu_custom_call.1} parent=47 // pred_region
          %s445 = sand.u32 %s98, 1
          %s446 = scalar_lea.sflag [#allocation4], %s445
          %s447 = sand.u32 %s98, 1
          %s448 = smul.addr %s447, 64
          %s449 = scalar_lea.vmem [#allocation7], %s448
          %451 = dma.done %s446, 1024
        $region52: #{tpu_custom_call.1} parent=47 // pred_fallthru
          _
      $region48: #{tpu_custom_call.1} parent=5 // pred_fallthru
        _
    $region6: #{tpu_custom_call.1} parent=1 // loop_footer
      %s20 = sadd.s32 1, %s16
    $region7: #{tpu_custom_call.1} parent=1 // loop_footer_branch
      %15 = sbr.rel target = $region3
    $region8: #{tpu_custom_call.1} parent=1 // loop_exit
      _
    %452 = vsyncpa [#allocation3], 1
    %s453 = scalar_lea.sflag [#allocation3], 1
    %454 = vsyncpa %s453, 1
    %455 = vsyncpa [#allocation6], 1
    %456 = vsyncpa [#allocation4], 1
    %s457 = scalar_lea.sflag [#allocation4], 1
    %458 = vsyncpa %s457, 1

</llo_original>
